<compile_context>
chip_gen: v6e
topology: v6e:2x2x1
jax: 0.10.0
libtpu: 0.0.40
codegen_flags: <defaults>
</compile_context>

<pallas_src>
import jax
import jax.numpy as jnp
from jax.experimental import pallas as pl
from jax.experimental.pallas import tpu as pltpu

LANE = 128   # lane width of the packed parameter slab and the merged output slab
_VMEM = pl.BlockSpec(memory_space=pltpu.MemorySpace.VMEM)


def _pad8(n):
    return -(-n // 8) * 8


# ----------------------------- parameter packing -----------------------------

def pack_params(gcn_ws, gcn_bs, out_w, out_b):
    """Pack every weight/bias into one (rows, LANE) f32 slab (sublane-aligned row offsets).

    Returns (slab, w_offs, b_offs): per-layer starting rows for the GCN layers, followed by
    the output Linear's W / b as the last entry of each tuple.
    """
    arrays, w_offs, b_offs = [], [], []
    r = 0

    def add(arr, off_list):
        nonlocal r
        off_list.append(r)
        arrays.append((r, arr))
        r += _pad8(arr.shape[0])

    for w, b in zip(gcn_ws, gcn_bs):
        add(w, w_offs)
        add(b, b_offs)
    add(out_w, w_offs)
    add(out_b, b_offs)

    slab = jnp.zeros((r, LANE), jnp.float32)
    for off, arr in arrays:
        slab = slab.at[off:off + arr.shape[0], :arr.shape[1]].set(arr.astype(jnp.float32))
    return slab, tuple(w_offs), tuple(b_offs)


# --------------------------------- Pallas kernel --------------------------------

def _make_fused_gnn_kernel(n, in_c, hid, out_rows, w_offs, b_offs):
    """Kernel: (a_hat, x, param_slab) -> merged (out_rows, LANE) prediction slab."""
    num_gcn = len(w_offs) - 1
    fins = (in_c,) + (hid,) * (num_gcn - 1)

    def kernel(a_ref, x_ref, p_ref, y_ref):
        f32 = jnp.float32
        a = a_ref[...]                                  # (n, n) f32, reused by every layer
        h = x_ref[...]                                  # (n, in_c) f32

        for i in range(num_gcn):
            fin = fins[i]
            w = p_ref[w_offs[i]:w_offs[i] + fin, :hid]  # static, sublane-aligned slice
            b = p_ref[b_offs[i]:b_offs[i] + 1, :hid]
            if fin < hid:
                # (A @ X) @ W : fewer MACs when F_in < F_out (first layer: 4 -> 32).
                h = jnp.dot(jnp.dot(a, h, preferred_element_type=f32), w,
                            preferred_element_type=f32)
            else:
                # A @ (X @ W)
                h = jnp.dot(a, jnp.dot(h, w, preferred_element_type=f32),
                            preferred_element_type=f32)
            h = jnp.maximum(h + b, 0.0)                 # bias + ReLU in f32 vregs

        # Output Linear with lane-padded weights -> lane-dense (n, LANE) result,
        # then mean pool (single graph).  Padded lanes are zero (Wout/bout zero-padded).
        wo = p_ref[w_offs[-1]:w_offs[-1] + hid, :]      # (hid, LANE)
        bo = p_ref[b_offs[-1]:b_offs[-1] + 1, :]        # (1, LANE)
        y = jnp.dot(h, wo, preferred_element_type=f32) + bo        # (n, LANE)
        pooled = jnp.mean(y, axis=0, keepdims=True)                # (1, LANE)

        # Single lane-dense output slab: rows [0, n) = node preds,
        # rows [n, out_rows) = replicated graph pred (wrapper reads row n).
        y_ref[0:n, :] = y
        y_ref[n:out_rows, :] = jnp.broadcast_to(pooled, (out_rows - n, LANE))

    return kernel


def build_forward(n, in_c, hid, out_c, w_offs, b_offs, slab_rows):
    """Returns a jitted forward(a_hat, x, slab) -> (node_preds, graph_preds)."""
    num_gcn = len(w_offs) - 1
    out_rows = n + 8   # pooled row replicated over one extra sublane tile

    flops = 2 * n * n * in_c + 2 * n * in_c * hid                      # layer 1: (A@X)@W1
    flops += (num_gcn - 1) * (2 * n * hid * hid + 2 * n * n * hid)      # hid->hid layers
    flops += 2 * n * hid * LANE + n * LANE                              # out Linear + pool
    bytes_accessed = 4 * (n * n + n * in_c + slab_rows * LANE + out_rows * LANE)

    call = pl.pallas_call(
        _make_fused_gnn_kernel(n, in_c, hid, out_rows, w_offs, b_offs),
        out_shape=jax.ShapeDtypeStruct((out_rows, LANE), jnp.float32),
        in_specs=[_VMEM, _VMEM, _VMEM],
        out_specs=_VMEM,
        cost_estimate=pl.CostEstimate(
            flops=flops, transcendentals=0, bytes_accessed=bytes_accessed),
    )

    @jax.jit
    def forward(a_hat, x, slab):
        y = call(a_hat, x, slab)
        return y[:n, :out_c], y[n:n + 1, :out_c]

    return forward


# ----------------------------- glue (plain JAX, one-time) -----------------------------

def normalized_adjacency(edge_index, num_nodes):
    """Dense GCN normalization D^-1/2 (A + I) D^-1/2 (self-loops added).

    One-time preprocessing, hoisted OUT of the per-step jitted path.
    """
    # TODO(synk): the data-dependent scatter-add adjacency build has no clean grid-less
    # Pallas form; it stays in XLA as one-time preprocessing.
    src, dst = edge_index[0], edge_index[1]
    a = jnp.zeros((num_nodes, num_nodes), jnp.float32).at[src, dst].add(1.0)
    a = a + jnp.eye(num_nodes, dtype=jnp.float32)
    deg = jnp.sum(a, axis=1)
    d_inv_sqrt = jnp.where(deg > 0, 1.0 / jnp.sqrt(deg), 0.0)
    return d_inv_sqrt[:, None] * a * d_inv_sqrt[None, :]


def init_params(key, in_channels, hidden_channels, out_channels, num_layers=4):
    """Deterministic Glorot-style init matching GCNConv/Linear shapes.

    num_layers=4 -> 3 GCNConv layers (in->hid, hid->hid, hid->hid) + output Linear,
    mirroring the PyTorch ModuleList construction.
    """
    dims = [(in_channels, hidden_channels)]
    dims += [(hidden_channels, hidden_channels)] * (num_layers - 2)
    params = {"gcn_w": [], "gcn_b": []}
    for fin, fout in dims:
        key, kw = jax.random.split(key)
        scale = jnp.sqrt(2.0 / (fin + fout))
        params["gcn_w"].append(scale * jax.random.normal(kw, (fin, fout), jnp.float32))
        params["gcn_b"].append(jnp.zeros((1, fout), jnp.float32))
    key, kw, kb = jax.random.split(key, 3)
    scale = jnp.sqrt(2.0 / (hidden_channels + out_channels))
    params["out_w"] = scale * jax.random.normal(kw, (hidden_channels, out_channels), jnp.float32)
    params["out_b"] = 0.01 * jax.random.normal(kb, (1, out_channels), jnp.float32)
    return params


def reference_forward(params, a_hat, x):
    """Pure-JAX reference mirroring the PyTorch forward (for sanity checking)."""
    h = x
    for w, b in zip(params["gcn_w"], params["gcn_b"]):
        h = jnp.maximum(a_hat @ (h @ w) + b, 0.0)
    node = h @ params["out_w"] + params["out_b"]
    graph = jnp.mean(node, axis=0, keepdims=True)
    return node, graph


# ---------------------------------------- main ----------------------------------------

if __name__ == "__main__":
    key = jax.random.PRNGKey(0)

    num_nodes = 16
    in_channels = 4
    hidden_channels = 32
    out_channels = 8

    key, kx = jax.random.split(key)
    x = jax.random.normal(kx, (num_nodes, in_channels), jnp.float32)

    # Ring graph, both directions (undirected).
    src = jnp.arange(num_nodes, dtype=jnp.int32)
    dst = (src + 1) % num_nodes
    edge_index = jnp.stack(
        [jnp.concatenate([src, dst]), jnp.concatenate([dst, src])], axis=0)

    params = init_params(key, in_channels, hidden_channels, out_channels, num_layers=4)

    # One-time preprocessing (hoisted out of the per-step path).
    a_hat = normalized_adjacency(edge_index, num_nodes)
    slab, w_offs, b_offs = pack_params(
        params["gcn_w"], params["gcn_b"], params["out_w"], params["out_b"])

    forward = build_forward(num_nodes, in_channels, hidden_channels, out_channels,
                            w_offs, b_offs, slab.shape[0])

    node_preds, graph_preds = forward(a_hat, x, slab)
    jax.block_until_ready((node_preds, graph_preds))

    # Sanity checks: shapes, finiteness, and agreement with the pure-JAX reference.
    assert node_preds.shape == (num_nodes, out_channels)
    assert graph_preds.shape == (1, out_channels)
    assert bool(jnp.all(jnp.isfinite(node_preds))) and bool(jnp.all(jnp.isfinite(graph_preds)))

    node_ref, graph_ref = reference_forward(params, a_hat, x)
    assert float(jnp.max(jnp.abs(node_preds - node_ref))) < 5e-2
    assert float(jnp.max(jnp.abs(graph_preds - graph_ref))) < 5e-2

    print("KERNEL_OK")
</pallas_src>

<mosaic_0001>
module attributes {stable_mosaic.version = 11 : i64} {
  func.func @kernel(%arg0: memref<16x16xf32, #tpu.memory_space<vmem>>, %arg1: memref<16x4xf32, #tpu.memory_space<vmem>>, %arg2: memref<136x128xf32, #tpu.memory_space<vmem>>, %arg3: memref<24x128xf32, #tpu.memory_space<vmem>>) attributes {dimension_semantics = [], scalar_prefetch = 0 : i64, scratch_operands = 0 : i64, tpu.core_type = #tpu.core_type<tc>} {
    %c0 = arith.constant 0 : index
    %c0_0 = arith.constant 0 : index
    %0 = vector.load %arg0[%c0, %c0_0] : memref<16x16xf32, #tpu.memory_space<vmem>>, vector<16x16xf32>
    %c0_1 = arith.constant 0 : index
    %c0_2 = arith.constant 0 : index
    %1 = vector.load %arg1[%c0_1, %c0_2] : memref<16x4xf32, #tpu.memory_space<vmem>>, vector<16x4xf32>
    %c0_3 = arith.constant 0 : index
    %c0_4 = arith.constant 0 : index
    %2 = vector.load %arg2[%c0_3, %c0_4] : memref<136x128xf32, #tpu.memory_space<vmem>>, vector<4x32xf32>
    %c8 = arith.constant 8 : index
    %c0_5 = arith.constant 0 : index
    %3 = vector.load %arg2[%c8, %c0_5] : memref<136x128xf32, #tpu.memory_space<vmem>>, vector<1x32xf32>
    %cst = arith.constant dense<0.000000e+00> : vector<16x4xf32>
    %4 = tpu.matmul %0, %1, %cst {dimension_numbers = #tpu.dot_dimension_numbers<[1], [0], [0], [1], [0, 0, 1, 1], [], []>} : vector<16x16xf32>, vector<16x4xf32>, vector<16x4xf32> -> vector<16x4xf32>
    %cst_6 = arith.constant dense<0.000000e+00> : vector<16x32xf32>
    %5 = tpu.matmul %4, %2, %cst_6 {dimension_numbers = #tpu.dot_dimension_numbers<[1], [0], [0], [1], [0, 0, 1, 1], [], []>} : vector<16x4xf32>, vector<4x32xf32>, vector<16x32xf32> -> vector<16x32xf32>
    %6 = vector.broadcast %3 : vector<1x32xf32> to vector<16x32xf32>
    %7 = arith.addf %5, %6 : vector<16x32xf32>
    %cst_7 = arith.constant 0.000000e+00 : f32
    %8 = vector.broadcast %cst_7 : f32 to vector<16x32xf32>
    %9 = arith.maximumf %7, %8 : vector<16x32xf32>
    %c16 = arith.constant 16 : index
    %c0_8 = arith.constant 0 : index
    %10 = vector.load %arg2[%c16, %c0_8] : memref<136x128xf32, #tpu.memory_space<vmem>>, vector<32x32xf32>
    %c48 = arith.constant 48 : index
    %c0_9 = arith.constant 0 : index
    %11 = vector.load %arg2[%c48, %c0_9] : memref<136x128xf32, #tpu.memory_space<vmem>>, vector<1x32xf32>
    %cst_10 = arith.constant dense<0.000000e+00> : vector<16x32xf32>
    %12 = tpu.matmul %9, %10, %cst_10 {dimension_numbers = #tpu.dot_dimension_numbers<[1], [0], [0], [1], [0, 0, 1, 1], [], []>} : vector<16x32xf32>, vector<32x32xf32>, vector<16x32xf32> -> vector<16x32xf32>
    %cst_11 = arith.constant dense<0.000000e+00> : vector<16x32xf32>
    %13 = tpu.matmul %0, %12, %cst_11 {dimension_numbers = #tpu.dot_dimension_numbers<[1], [0], [0], [1], [0, 0, 1, 1], [], []>} : vector<16x16xf32>, vector<16x32xf32>, vector<16x32xf32> -> vector<16x32xf32>
    %14 = vector.broadcast %11 : vector<1x32xf32> to vector<16x32xf32>
    %15 = arith.addf %13, %14 : vector<16x32xf32>
    %cst_12 = arith.constant 0.000000e+00 : f32
    %16 = vector.broadcast %cst_12 : f32 to vector<16x32xf32>
    %17 = arith.maximumf %15, %16 : vector<16x32xf32>
    %c56 = arith.constant 56 : index
    %c0_13 = arith.constant 0 : index
    %18 = vector.load %arg2[%c56, %c0_13] : memref<136x128xf32, #tpu.memory_space<vmem>>, vector<32x32xf32>
    %c88 = arith.constant 88 : index
    %c0_14 = arith.constant 0 : index
    %19 = vector.load %arg2[%c88, %c0_14] : memref<136x128xf32, #tpu.memory_space<vmem>>, vector<1x32xf32>
    %cst_15 = arith.constant dense<0.000000e+00> : vector<16x32xf32>
    %20 = tpu.matmul %17, %18, %cst_15 {dimension_numbers = #tpu.dot_dimension_numbers<[1], [0], [0], [1], [0, 0, 1, 1], [], []>} : vector<16x32xf32>, vector<32x32xf32>, vector<16x32xf32> -> vector<16x32xf32>
    %cst_16 = arith.constant dense<0.000000e+00> : vector<16x32xf32>
    %21 = tpu.matmul %0, %20, %cst_16 {dimension_numbers = #tpu.dot_dimension_numbers<[1], [0], [0], [1], [0, 0, 1, 1], [], []>} : vector<16x16xf32>, vector<16x32xf32>, vector<16x32xf32> -> vector<16x32xf32>
    %22 = vector.broadcast %19 : vector<1x32xf32> to vector<16x32xf32>
    %23 = arith.addf %21, %22 : vector<16x32xf32>
    %cst_17 = arith.constant 0.000000e+00 : f32
    %24 = vector.broadcast %cst_17 : f32 to vector<16x32xf32>
    %25 = arith.maximumf %23, %24 : vector<16x32xf32>
    %c96 = arith.constant 96 : index
    %c0_18 = arith.constant 0 : index
    %26 = vector.load %arg2[%c96, %c0_18] : memref<136x128xf32, #tpu.memory_space<vmem>>, vector<32x128xf32>
    %c128 = arith.constant 128 : index
    %c0_19 = arith.constant 0 : index
    %27 = vector.load %arg2[%c128, %c0_19] : memref<136x128xf32, #tpu.memory_space<vmem>>, vector<1x128xf32>
    %cst_20 = arith.constant dense<0.000000e+00> : vector<16x128xf32>
    %28 = tpu.matmul %25, %26, %cst_20 {dimension_numbers = #tpu.dot_dimension_numbers<[1], [0], [0], [1], [0, 0, 1, 1], [], []>} : vector<16x32xf32>, vector<32x128xf32>, vector<16x128xf32> -> vector<16x128xf32>
    %29 = vector.broadcast %27 : vector<1x128xf32> to vector<16x128xf32>
    %30 = arith.addf %28, %29 : vector<16x128xf32>
    %cst_21 = arith.constant dense<0.000000e+00> : vector<128xf32>
    %31 = vector.multi_reduction <add>, %30, %cst_21 [0] : vector<16x128xf32> to vector<128xf32>
    %32 = vector.shape_cast %31 : vector<128xf32> to vector<1x128xf32>
    %cst_22 = arith.constant 1.600000e+01 : f32
    %33 = vector.broadcast %cst_22 : f32 to vector<1x128xf32>
    %34 = arith.divf %32, %33 : vector<1x128xf32>
    %c0_23 = arith.constant 0 : index
    %c0_24 = arith.constant 0 : index
    %35 = vector.load %arg3[%c0_23, %c0_24] : memref<24x128xf32, #tpu.memory_space<vmem>>, vector<16x128xf32>
    tpu.vector_store %arg3[%c0_23, %c0_24], %30 {strides = array<i32>} : memref<24x128xf32, #tpu.memory_space<vmem>>, vector<16x128xf32>,
    %36 = vector.shape_cast %34 : vector<1x128xf32> to vector<1x128xf32>
    %37 = vector.broadcast %36 : vector<1x128xf32> to vector<8x128xf32>
    %c16_25 = arith.constant 16 : index
    %c0_26 = arith.constant 0 : index
    %38 = vector.load %arg3[%c16_25, %c0_26] : memref<24x128xf32, #tpu.memory_space<vmem>>, vector<8x128xf32>
    tpu.vector_store %arg3[%c16_25, %c0_26], %37 {strides = array<i32>} : memref<24x128xf32, #tpu.memory_space<vmem>>, vector<8x128xf32>,
    return
  }
}

</mosaic_0001>

<llo_original>
// kernel: forward.1
$region0: #{forward.1}
  #allocation0 [shape = 'u32[]', space=smem, size = 0x4, offset = 0x4, fixed_abs, tag = 'smem constant byte address 0x4 - core index']
  #allocation1 [shape = 'u32[144,128]{1,0:T(1,128)}', space=vmem, size = 0x12000, scoped, tag = 'internal scratch']
  %s0 = inlined_call_operand.vmem [shape: f32[16,16], index: 0, kind: input, shape index: {}]
  %s1 = inlined_call_operand.vmem [shape: f32[16,4], index: 1, kind: input, shape index: {}]
  %s2 = inlined_call_operand.hbm [shape: f32[136,128], index: 2, kind: input, shape index: {}]
  %s3 = inlined_call_operand.vmem [shape: f32[24,128], index: 3, kind: output, shape index: {}]
  %s4 = sld [smem:[#allocation0]]
  $region26: #{forward.1} parent=0
    _
  %s6 = ssub.s32 1, %s4
  %s7 = scalar_select 0, %s6, %s4
  $region1: #{forward.1} parent=0
    #allocation2 [shape = 'u8[69632]{0}', space=vmem, size = 0x11000, scoped, tag = 'input window, operand 2, single buffered']
    #allocation3 [shape = 's32[1]{0}', space=sflag, size = 0x4, scoped, tag = 'scoped memory for forward.1']
    %8 = vsyncpa [#allocation3], 0
    // Predicated region
    $region2: #{forward.1} parent=1 // pred_check
      _
    $region3: #{forward.1} parent=1 // pred_check_branch
      %10 = sbr.rel (0) target = $region5
    $region4: #{forward.1} parent=1 // pred_region
      _
    $region5: #{forward.1} parent=1 // pred_fallthru
      _
    // Predicated region
    $region6: #{forward.1} parent=1 // pred_check
      _
    $region7: #{forward.1} parent=1 // pred_check_branch
      %12 = sbr.rel (0) target = $region9
    $region8: #{forward.1} parent=1 // pred_region
      _
    $region9: #{forward.1} parent=1 // pred_fallthru
      _
    // Predicated region
    $region10: #{forward.1} parent=1 // pred_check
      _
    $region11: #{forward.1} parent=1 // pred_check_branch
      %14 = sbr.rel (0) target = $region13
    $region12: #{forward.1} parent=1 // pred_region
      %s16 = ssub.s32 2176, 2176
      %17 = vsyncadd [#allocation3], %s16
      %s18 = sshll.u32 [#allocation2], 4
      %s19 = int_to_ptr.vmem [resolvable:$true] %s18
      %24 = dma.hbm_to_vmem [thread:$0]  %s2, 2176, %s19, [#allocation3], 128, 128, 8
    $region13: #{forward.1} parent=1 // pred_fallthru
      _
    // Predicated region
    $region14: #{forward.1} parent=1 // pred_check
      _
    $region15: #{forward.1} parent=1 // pred_check_branch
      %26 = sbr.rel (0) target = $region17
    $region16: #{forward.1} parent=1 // pred_region
      %27 = dma.done [#allocation3], 2176
    $region17: #{forward.1} parent=1 // pred_fallthru
      _
    %v28 = vld [vmem:[%s0] sm:$0xff]
    %v29 = vld [vmem:[%s0 + $0x8] sm:$0xff]
    %v30 = vld [vmem:[%s1] sm:$0xff]
    %v31 = vld [vmem:[%s1 + $0x8] sm:$0xff]
    %v32 = vld [vmem:[#allocation2] sm:$0xf]
    %v33 = vld [vmem:[#allocation2 + $0x8] sm:$0x1]
    %vm34 = vcmask 130048
    %v36 = vsel %vm34, %v28, 0
    %v39 = vsel %vm34, %v29, 0
    %41 = vmatprep.subr.mxu0 0.0
    %42 = vmatpush1.msra.mxu0 0.0
    %43 = vmatprep.subr.mxu0 0.0
    %44 = vmatpush1.msra.mxu0 0.0
    %45 = vmatprep.subr.mxu0 0.0
    %46 = vmatpush1.msra.mxu0 0.0
    %47 = vmatprep.subr.mxu0 0.0
    %48 = vmatpush1.msra.mxu0 0.0
    %49 = vmatprep.subr.mxu0 0.0
    %50 = vmatpush1.msra.mxu0 0.0
    %51 = vmatprep.subr.mxu0 0.0
    %52 = vmatpush1.msra.mxu0 0.0
    %53 = vmatprep.subr.mxu0 0.0
    %54 = vmatpush1.msra.mxu0 0.0
    %55 = vmatprep.subr.mxu0 0.0
    %56 = vmatpush1.msra.mxu0 0.0
    %57 = vmatprep.subr.mxu0 0.0
    %58 = vmatpush1.msra.mxu0 0.0
    %59 = vmatprep.subr.mxu0 0.0
    %60 = vmatpush1.msra.mxu0 0.0
    %61 = vmatprep.subr.mxu0 0.0
    %62 = vmatpush1.msra.mxu0 0.0
    %63 = vmatprep.subr.mxu0 0.0
    %64 = vmatpush1.msra.mxu0 0.0
    %65 = vmatprep.subr.mxu0 0.0
    %66 = vmatpush1.msra.mxu0 0.0
    %67 = vmatprep.subr.mxu0 0.0
    %68 = vmatpush1.msra.mxu0 0.0
    %69 = vmatprep.subr.mxu0 0.0
    %70 = vmatpush1.msra.mxu0 %v31
    %71 = vmatprep.subr.mxu0 0.0
    %72 = vmatpush1.msra.mxu0 %v30
    %73 = vmatprep.subr.mxu0 0.0
    %74 = vmatpush2.msra.mxu0 0.0
    %75 = vmatprep.subr.mxu0 0.0
    %76 = vmatpush2.msra.mxu0 0.0
    %77 = vmatprep.subr.mxu0 0.0
    %78 = vmatpush2.msra.mxu0 0.0
    %79 = vmatprep.subr.mxu0 0.0
    %80 = vmatpush2.msra.mxu0 0.0
    %81 = vmatprep.subr.mxu0 0.0
    %82 = vmatpush2.msra.mxu0 0.0
    %83 = vmatprep.subr.mxu0 0.0
    %84 = vmatpush2.msra.mxu0 0.0
    %85 = vmatprep.subr.mxu0 0.0
    %86 = vmatpush2.msra.mxu0 0.0
    %87 = vmatprep.subr.mxu0 0.0
    %88 = vmatpush2.msra.mxu0 0.0
    %89 = vmatprep.subr.mxu0 0.0
    %90 = vmatpush2.msra.mxu0 0.0
    %91 = vmatprep.subr.mxu0 0.0
    %92 = vmatpush2.msra.mxu0 0.0
    %93 = vmatprep.subr.mxu0 0.0
    %94 = vmatpush2.msra.mxu0 0.0
    %95 = vmatprep.subr.mxu0 0.0
    %96 = vmatpush2.msra.mxu0 0.0
    %97 = vmatprep.subr.mxu0 0.0
    %98 = vmatpush2.msra.mxu0 0.0
    %99 = vmatprep.subr.mxu0 0.0
    %100 = vmatpush2.msra.mxu0 0.0
    %101 = vmatprep.subr.mxu0 0.0
    %102 = vmatpush2.msra.mxu0 0.0
    %103 = vmatprep.subr.mxu0 0.0
    %104 = vmatpush2.msra.mxu0 0.0
    %105 = vmatprep.mubr.f32.mxu0 0.0
    %106 = vmatmul.mubr.f32.gmra.mxu0 %v36
    %v107 = vpop.f32.mrf.mxu0
    %v108 = vadd.f32 0.0, %v107
    %v109 = vpop.f32.mrf.mxu0
    %110 = vmatprep.mubr.f32.mxu0 0.0
    %111 = vmatmul.mubr.f32.gmra.mxu0 %v39
    %v112 = vpop.f32.mrf.mxu0
    %v113 = vadd.f32 0.0, %v112
    %v114 = vpop.f32.mrf.mxu0
    %115 = vdwg.mxu0
    %v116 = vlaneseq
    %v117 = vshrl.u32 %v116, 7
    %v118 = vsub.s32 0, %v117
    %v119 = vrot.slane %v33, %v118
    %vm120 = vcmask 31744
    %v122 = vsel %vm120, %v108, 0
    %v125 = vsel %vm120, %v113, 0
    %vm127 = vcmask 1043456
    %v129 = vsel %vm127, %v32, 0
    %131 = vmatprep.subr.mxu0 0.0
    %132 = vmatpush1.msra.mxu0 0.0
    %133 = vmatprep.subr.mxu0 0.0
    %134 = vmatpush1.msra.mxu0 0.0
    %135 = vmatprep.subr.mxu0 0.0
    %136 = vmatpush1.msra.mxu0 0.0
    %137 = vmatprep.subr.mxu0 0.0
    %138 = vmatpush1.msra.mxu0 0.0
    %139 = vmatprep.subr.mxu0 0.0
    %140 = vmatpush1.msra.mxu0 0.0
    %141 = vmatprep.subr.mxu0 0.0
    %142 = vmatpush1.msra.mxu0 0.0
    %143 = vmatprep.subr.mxu0 0.0
    %144 = vmatpush1.msra.mxu0 0.0
    %145 = vmatprep.subr.mxu0 0.0
    %146 = vmatpush1.msra.mxu0 0.0
    %147 = vmatprep.subr.mxu0 0.0
    %148 = vmatpush1.msra.mxu0 0.0
    %149 = vmatprep.subr.mxu0 0.0
    %150 = vmatpush1.msra.mxu0 0.0
    %151 = vmatprep.subr.mxu0 0.0
    %152 = vmatpush1.msra.mxu0 0.0
    %153 = vmatprep.subr.mxu0 0.0
    %154 = vmatpush1.msra.mxu0 0.0
    %155 = vmatprep.subr.mxu0 0.0
    %156 = vmatpush1.msra.mxu0 0.0
    %157 = vmatprep.subr.mxu0 0.0
    %158 = vmatpush1.msra.mxu0 0.0
    %159 = vmatprep.subr.mxu0 0.0
    %160 = vmatpush1.msra.mxu0 0.0
    %161 = vmatprep.subr.mxu0 0.0
    %162 = vmatpush1.msra.mxu0 %v129
    %163 = vmatprep.subr.mxu0 0.0
    %164 = vmatpush2.msra.mxu0 0.0
    %165 = vmatprep.subr.mxu0 0.0
    %166 = vmatpush2.msra.mxu0 0.0
    %167 = vmatprep.subr.mxu0 0.0
    %168 = vmatpush2.msra.mxu0 0.0
    %169 = vmatprep.subr.mxu0 0.0
    %170 = vmatpush2.msra.mxu0 0.0
    %171 = vmatprep.subr.mxu0 0.0
    %172 = vmatpush2.msra.mxu0 0.0
    %173 = vmatprep.subr.mxu0 0.0
    %174 = vmatpush2.msra.mxu0 0.0
    %175 = vmatprep.subr.mxu0 0.0
    %176 = vmatpush2.msra.mxu0 0.0
    %177 = vmatprep.subr.mxu0 0.0
    %178 = vmatpush2.msra.mxu0 0.0
    %179 = vmatprep.subr.mxu0 0.0
    %180 = vmatpush2.msra.mxu0 0.0
    %181 = vmatprep.subr.mxu0 0.0
    %182 = vmatpush2.msra.mxu0 0.0
    %183 = vmatprep.subr.mxu0 0.0
    %184 = vmatpush2.msra.mxu0 0.0
    %185 = vmatprep.subr.mxu0 0.0
    %186 = vmatpush2.msra.mxu0 0.0
    %187 = vmatprep.subr.mxu0 0.0
    %188 = vmatpush2.msra.mxu0 0.0
    %189 = vmatprep.subr.mxu0 0.0
    %190 = vmatpush2.msra.mxu0 0.0
    %191 = vmatprep.subr.mxu0 0.0
    %192 = vmatpush2.msra.mxu0 0.0
    %193 = vmatprep.subr.mxu0 0.0
    %194 = vmatpush2.msra.mxu0 0.0
    %195 = vmatprep.mubr.f32.mxu0 0.0
    %196 = vmatmul.mubr.f32.gmra.mxu0 %v122
    %v197 = vpop.f32.mrf.mxu0
    %v198 = vadd.f32 %v119, %v197
    %v199 = vpop.f32.mrf.mxu0
    %200 = vmatprep.mubr.f32.mxu0 0.0
    %201 = vmatmul.mubr.f32.gmra.mxu0 %v125
    %v202 = vpop.f32.mrf.mxu0
    %v203 = vadd.f32 %v119, %v202
    %v204 = vpop.f32.mrf.mxu0
    %205 = vdwg.mxu0
    %v206 = vmax.f32 %v198, 0.0
    %v207 = vmax.f32 %v203, 0.0
    %v208 = vld [vmem:[#allocation2 + $0x10] sm:$0xff]
    %v209 = vld [vmem:[#allocation2 + $0x18] sm:$0xff]
    %v210 = vld [vmem:[#allocation2 + $0x20] sm:$0xff]
    %v211 = vld [vmem:[#allocation2 + $0x28] sm:$0xff]
    %v212 = vld [vmem:[#allocation2 + $0x30] sm:$0x1]
    %vm213 = vcmask 261120
    %v215 = vsel %vm213, %v206, 0
    %v218 = vsel %vm213, %v207, 0
    %220 = vmatprep.subr.mxu0 0.0
    %221 = vmatpush1.msra.mxu0 0.0
    %222 = vmatprep.subr.mxu0 0.0
    %223 = vmatpush1.msra.mxu0 0.0
    %224 = vmatprep.subr.mxu0 0.0
    %225 = vmatpush1.msra.mxu0 0.0
    %226 = vmatprep.subr.mxu0 0.0
    %227 = vmatpush1.msra.mxu0 0.0
    %228 = vmatprep.subr.mxu0 0.0
    %229 = vmatpush1.msra.mxu0 0.0
    %230 = vmatprep.subr.mxu0 0.0
    %231 = vmatpush1.msra.mxu0 0.0
    %232 = vmatprep.subr.mxu0 0.0
    %233 = vmatpush1.msra.mxu0 0.0
    %234 = vmatprep.subr.mxu0 0.0
    %235 = vmatpush1.msra.mxu0 0.0
    %236 = vmatprep.subr.mxu0 0.0
    %237 = vmatpush1.msra.mxu0 0.0
    %238 = vmatprep.subr.mxu0 0.0
    %239 = vmatpush1.msra.mxu0 0.0
    %240 = vmatprep.subr.mxu0 0.0
    %241 = vmatpush1.msra.mxu0 0.0
    %242 = vmatprep.subr.mxu0 0.0
    %243 = vmatpush1.msra.mxu0 0.0
    %244 = vmatprep.subr.mxu0 0.0
    %245 = vmatpush1.msra.mxu0 %v211
    %246 = vmatprep.subr.mxu0 0.0
    %247 = vmatpush1.msra.mxu0 %v210
    %248 = vmatprep.subr.mxu0 0.0
    %249 = vmatpush1.msra.mxu0 %v209
    %250 = vmatprep.subr.mxu0 0.0
    %251 = vmatpush1.msra.mxu0 %v208
    %252 = vmatprep.subr.mxu0 0.0
    %253 = vmatpush2.msra.mxu0 0.0
    %254 = vmatprep.subr.mxu0 0.0
    %255 = vmatpush2.msra.mxu0 0.0
    %256 = vmatprep.subr.mxu0 0.0
    %257 = vmatpush2.msra.mxu0 0.0
    %258 = vmatprep.subr.mxu0 0.0
    %259 = vmatpush2.msra.mxu0 0.0
    %260 = vmatprep.subr.mxu0 0.0
    %261 = vmatpush2.msra.mxu0 0.0
    %262 = vmatprep.subr.mxu0 0.0
    %263 = vmatpush2.msra.mxu0 0.0
    %264 = vmatprep.subr.mxu0 0.0
    %265 = vmatpush2.msra.mxu0 0.0
    %266 = vmatprep.subr.mxu0 0.0
    %267 = vmatpush2.msra.mxu0 0.0
    %268 = vmatprep.subr.mxu0 0.0
    %269 = vmatpush2.msra.mxu0 0.0
    %270 = vmatprep.subr.mxu0 0.0
    %271 = vmatpush2.msra.mxu0 0.0
    %272 = vmatprep.subr.mxu0 0.0
    %273 = vmatpush2.msra.mxu0 0.0
    %274 = vmatprep.subr.mxu0 0.0
    %275 = vmatpush2.msra.mxu0 0.0
    %276 = vmatprep.subr.mxu0 0.0
    %277 = vmatpush2.msra.mxu0 0.0
    %278 = vmatprep.subr.mxu0 0.0
    %279 = vmatpush2.msra.mxu0 0.0
    %280 = vmatprep.subr.mxu0 0.0
    %281 = vmatpush2.msra.mxu0 0.0
    %282 = vmatprep.subr.mxu0 0.0
    %283 = vmatpush2.msra.mxu0 0.0
    %284 = vmatprep.mubr.f32.mxu0 0.0
    %285 = vmatmul.mubr.f32.gmra.mxu0 %v215
    %v286 = vpop.f32.mrf.mxu0
    %v287 = vadd.f32 0.0, %v286
    %v288 = vpop.f32.mrf.mxu0
    %289 = vmatprep.mubr.f32.mxu0 0.0
    %290 = vmatmul.mubr.f32.gmra.mxu0 %v218
    %v291 = vpop.f32.mrf.mxu0
    %v292 = vadd.f32 0.0, %v291
    %v293 = vpop.f32.mrf.mxu0
    %294 = vdwg.mxu0
    %v295 = vlaneseq
    %v296 = vshrl.u32 %v295, 7
    %v297 = vsub.s32 0, %v296
    %v298 = vrot.slane %v212, %v297
    %299 = vmatprep.subr.mxu0 0.0
    %300 = vmatpush1.msra.mxu0 0.0
    %301 = vmatprep.subr.mxu0 0.0
    %302 = vmatpush1.msra.mxu0 0.0
    %303 = vmatprep.subr.mxu0 0.0
    %304 = vmatpush1.msra.mxu0 0.0
    %305 = vmatprep.subr.mxu0 0.0
    %306 = vmatpush1.msra.mxu0 0.0
    %307 = vmatprep.subr.mxu0 0.0
    %308 = vmatpush1.msra.mxu0 0.0
    %309 = vmatprep.subr.mxu0 0.0
    %310 = vmatpush1.msra.mxu0 0.0
    %311 = vmatprep.subr.mxu0 0.0
    %312 = vmatpush1.msra.mxu0 0.0
    %313 = vmatprep.subr.mxu0 0.0
    %314 = vmatpush1.msra.mxu0 0.0
    %315 = vmatprep.subr.mxu0 0.0
    %316 = vmatpush1.msra.mxu0 0.0
    %317 = vmatprep.subr.mxu0 0.0
    %318 = vmatpush1.msra.mxu0 0.0
    %319 = vmatprep.subr.mxu0 0.0
    %320 = vmatpush1.msra.mxu0 0.0
    %321 = vmatprep.subr.mxu0 0.0
    %322 = vmatpush1.msra.mxu0 0.0
    %323 = vmatprep.subr.mxu0 0.0
    %324 = vmatpush1.msra.mxu0 0.0
    %325 = vmatprep.subr.mxu0 0.0
    %326 = vmatpush1.msra.mxu0 0.0
    %327 = vmatprep.subr.mxu0 0.0
    %328 = vmatpush1.msra.mxu0 %v292
    %329 = vmatprep.subr.mxu0 0.0
    %330 = vmatpush1.msra.mxu0 %v287
    %331 = vmatprep.subr.mxu0 0.0
    %332 = vmatpush2.msra.mxu0 0.0
    %333 = vmatprep.subr.mxu0 0.0
    %334 = vmatpush2.msra.mxu0 0.0
    %335 = vmatprep.subr.mxu0 0.0
    %336 = vmatpush2.msra.mxu0 0.0
    %337 = vmatprep.subr.mxu0 0.0
    %338 = vmatpush2.msra.mxu0 0.0
    %339 = vmatprep.subr.mxu0 0.0
    %340 = vmatpush2.msra.mxu0 0.0
    %341 = vmatprep.subr.mxu0 0.0
    %342 = vmatpush2.msra.mxu0 0.0
    %343 = vmatprep.subr.mxu0 0.0
    %344 = vmatpush2.msra.mxu0 0.0
    %345 = vmatprep.subr.mxu0 0.0
    %346 = vmatpush2.msra.mxu0 0.0
    %347 = vmatprep.subr.mxu0 0.0
    %348 = vmatpush2.msra.mxu0 0.0
    %349 = vmatprep.subr.mxu0 0.0
    %350 = vmatpush2.msra.mxu0 0.0
    %351 = vmatprep.subr.mxu0 0.0
    %352 = vmatpush2.msra.mxu0 0.0
    %353 = vmatprep.subr.mxu0 0.0
    %354 = vmatpush2.msra.mxu0 0.0
    %355 = vmatprep.subr.mxu0 0.0
    %356 = vmatpush2.msra.mxu0 0.0
    %357 = vmatprep.subr.mxu0 0.0
    %358 = vmatpush2.msra.mxu0 0.0
    %359 = vmatprep.subr.mxu0 0.0
    %360 = vmatpush2.msra.mxu0 0.0
    %361 = vmatprep.subr.mxu0 0.0
    %362 = vmatpush2.msra.mxu0 0.0
    %363 = vmatprep.mubr.f32.mxu0 0.0
    %364 = vmatmul.mubr.f32.gmra.mxu0 %v36
    %v365 = vpop.f32.mrf.mxu0
    %v366 = vadd.f32 %v298, %v365
    %v367 = vpop.f32.mrf.mxu0
    %368 = vmatprep.mubr.f32.mxu0 0.0
    %369 = vmatmul.mubr.f32.gmra.mxu0 %v39
    %v370 = vpop.f32.mrf.mxu0
    %v371 = vadd.f32 %v298, %v370
    %v372 = vpop.f32.mrf.mxu0
    %373 = vdwg.mxu0
    %v374 = vmax.f32 %v366, 0.0
    %v375 = vmax.f32 %v371, 0.0
    %v376 = vld [vmem:[#allocation2 + $0x38] sm:$0xff]
    %v377 = vld [vmem:[#allocation2 + $0x40] sm:$0xff]
    %v378 = vld [vmem:[#allocation2 + $0x48] sm:$0xff]
    %v379 = vld [vmem:[#allocation2 + $0x50] sm:$0xff]
    %v380 = vld [vmem:[#allocation2 + $0x58] sm:$0x1]
    %v382 = vsel %vm213, %v374, 0
    %v385 = vsel %vm213, %v375, 0
    %387 = vmatprep.subr.mxu0 0.0
    %388 = vmatpush1.msra.mxu0 0.0
    %389 = vmatprep.subr.mxu0 0.0
    %390 = vmatpush1.msra.mxu0 0.0
    %391 = vmatprep.subr.mxu0 0.0
    %392 = vmatpush1.msra.mxu0 0.0
    %393 = vmatprep.subr.mxu0 0.0
    %394 = vmatpush1.msra.mxu0 0.0
    %395 = vmatprep.subr.mxu0 0.0
    %396 = vmatpush1.msra.mxu0 0.0
    %397 = vmatprep.subr.mxu0 0.0
    %398 = vmatpush1.msra.mxu0 0.0
    %399 = vmatprep.subr.mxu0 0.0
    %400 = vmatpush1.msra.mxu0 0.0
    %401 = vmatprep.subr.mxu0 0.0
    %402 = vmatpush1.msra.mxu0 0.0
    %403 = vmatprep.subr.mxu0 0.0
    %404 = vmatpush1.msra.mxu0 0.0
    %405 = vmatprep.subr.mxu0 0.0
    %406 = vmatpush1.msra.mxu0 0.0
    %407 = vmatprep.subr.mxu0 0.0
    %408 = vmatpush1.msra.mxu0 0.0
    %409 = vmatprep.subr.mxu0 0.0
    %410 = vmatpush1.msra.mxu0 0.0
    %411 = vmatprep.subr.mxu0 0.0
    %412 = vmatpush1.msra.mxu0 %v379
    %413 = vmatprep.subr.mxu0 0.0
    %414 = vmatpush1.msra.mxu0 %v378
    %415 = vmatprep.subr.mxu0 0.0
    %416 = vmatpush1.msra.mxu0 %v377
    %417 = vmatprep.subr.mxu0 0.0
    %418 = vmatpush1.msra.mxu0 %v376
    %419 = vmatprep.subr.mxu0 0.0
    %420 = vmatpush2.msra.mxu0 0.0
    %421 = vmatprep.subr.mxu0 0.0
    %422 = vmatpush2.msra.mxu0 0.0
    %423 = vmatprep.subr.mxu0 0.0
    %424 = vmatpush2.msra.mxu0 0.0
    %425 = vmatprep.subr.mxu0 0.0
    %426 = vmatpush2.msra.mxu0 0.0
    %427 = vmatprep.subr.mxu0 0.0
    %428 = vmatpush2.msra.mxu0 0.0
    %429 = vmatprep.subr.mxu0 0.0
    %430 = vmatpush2.msra.mxu0 0.0
    %431 = vmatprep.subr.mxu0 0.0
    %432 = vmatpush2.msra.mxu0 0.0
    %433 = vmatprep.subr.mxu0 0.0
    %434 = vmatpush2.msra.mxu0 0.0
    %435 = vmatprep.subr.mxu0 0.0
    %436 = vmatpush2.msra.mxu0 0.0
    %437 = vmatprep.subr.mxu0 0.0
    %438 = vmatpush2.msra.mxu0 0.0
    %439 = vmatprep.subr.mxu0 0.0
    %440 = vmatpush2.msra.mxu0 0.0
    %441 = vmatprep.subr.mxu0 0.0
    %442 = vmatpush2.msra.mxu0 0.0
    %443 = vmatprep.subr.mxu0 0.0
    %444 = vmatpush2.msra.mxu0 0.0
    %445 = vmatprep.subr.mxu0 0.0
    %446 = vmatpush2.msra.mxu0 0.0
    %447 = vmatprep.subr.mxu0 0.0
    %448 = vmatpush2.msra.mxu0 0.0
    %449 = vmatprep.subr.mxu0 0.0
    %450 = vmatpush2.msra.mxu0 0.0
    %451 = vmatprep.mubr.f32.mxu0 0.0
    %452 = vmatmul.mubr.f32.gmra.mxu0 %v382
    %v453 = vpop.f32.mrf.mxu0
    %v454 = vadd.f32 0.0, %v453
    %v455 = vpop.f32.mrf.mxu0
    %456 = vmatprep.mubr.f32.mxu0 0.0
    %457 = vmatmul.mubr.f32.gmra.mxu0 %v385
    %v458 = vpop.f32.mrf.mxu0
    %v459 = vadd.f32 0.0, %v458
    %v460 = vpop.f32.mrf.mxu0
    %461 = vdwg.mxu0
    %v462 = vlaneseq
    %v463 = vshrl.u32 %v462, 7
    %v464 = vsub.s32 0, %v463
    %v465 = vrot.slane %v380, %v464
    %466 = vmatprep.subr.mxu0 0.0
    %467 = vmatpush1.msra.mxu0 0.0
    %468 = vmatprep.subr.mxu0 0.0
    %469 = vmatpush1.msra.mxu0 0.0
    %470 = vmatprep.subr.mxu0 0.0
    %471 = vmatpush1.msra.mxu0 0.0
    %472 = vmatprep.subr.mxu0 0.0
    %473 = vmatpush1.msra.mxu0 0.0
    %474 = vmatprep.subr.mxu0 0.0
    %475 = vmatpush1.msra.mxu0 0.0
    %476 = vmatprep.subr.mxu0 0.0
    %477 = vmatpush1.msra.mxu0 0.0
    %478 = vmatprep.subr.mxu0 0.0
    %479 = vmatpush1.msra.mxu0 0.0
    %480 = vmatprep.subr.mxu0 0.0
    %481 = vmatpush1.msra.mxu0 0.0
    %482 = vmatprep.subr.mxu0 0.0
    %483 = vmatpush1.msra.mxu0 0.0
    %484 = vmatprep.subr.mxu0 0.0
    %485 = vmatpush1.msra.mxu0 0.0
    %486 = vmatprep.subr.mxu0 0.0
    %487 = vmatpush1.msra.mxu0 0.0
    %488 = vmatprep.subr.mxu0 0.0
    %489 = vmatpush1.msra.mxu0 0.0
    %490 = vmatprep.subr.mxu0 0.0
    %491 = vmatpush1.msra.mxu0 0.0
    %492 = vmatprep.subr.mxu0 0.0
    %493 = vmatpush1.msra.mxu0 0.0
    %494 = vmatprep.subr.mxu0 0.0
    %495 = vmatpush1.msra.mxu0 %v459
    %496 = vmatprep.subr.mxu0 0.0
    %497 = vmatpush1.msra.mxu0 %v454
    %498 = vmatprep.subr.mxu0 0.0
    %499 = vmatpush2.msra.mxu0 0.0
    %500 = vmatprep.subr.mxu0 0.0
    %501 = vmatpush2.msra.mxu0 0.0
    %502 = vmatprep.subr.mxu0 0.0
    %503 = vmatpush2.msra.mxu0 0.0
    %504 = vmatprep.subr.mxu0 0.0
    %505 = vmatpush2.msra.mxu0 0.0
    %506 = vmatprep.subr.mxu0 0.0
    %507 = vmatpush2.msra.mxu0 0.0
    %508 = vmatprep.subr.mxu0 0.0
    %509 = vmatpush2.msra.mxu0 0.0
    %510 = vmatprep.subr.mxu0 0.0
    %511 = vmatpush2.msra.mxu0 0.0
    %512 = vmatprep.subr.mxu0 0.0
    %513 = vmatpush2.msra.mxu0 0.0
    %514 = vmatprep.subr.mxu0 0.0
    %515 = vmatpush2.msra.mxu0 0.0
    %516 = vmatprep.subr.mxu0 0.0
    %517 = vmatpush2.msra.mxu0 0.0
    %518 = vmatprep.subr.mxu0 0.0
    %519 = vmatpush2.msra.mxu0 0.0
    %520 = vmatprep.subr.mxu0 0.0
    %521 = vmatpush2.msra.mxu0 0.0
    %522 = vmatprep.subr.mxu0 0.0
    %523 = vmatpush2.msra.mxu0 0.0
    %524 = vmatprep.subr.mxu0 0.0
    %525 = vmatpush2.msra.mxu0 0.0
    %526 = vmatprep.subr.mxu0 0.0
    %527 = vmatpush2.msra.mxu0 0.0
    %528 = vmatprep.subr.mxu0 0.0
    %529 = vmatpush2.msra.mxu0 0.0
    %530 = vmatprep.mubr.f32.mxu0 0.0
    %531 = vmatmul.mubr.f32.gmra.mxu0 %v36
    %v532 = vpop.f32.mrf.mxu0
    %v533 = vadd.f32 %v465, %v532
    %v534 = vpop.f32.mrf.mxu0
    %535 = vmatprep.mubr.f32.mxu0 0.0
    %536 = vmatmul.mubr.f32.gmra.mxu0 %v39
    %v537 = vpop.f32.mrf.mxu0
    %v538 = vadd.f32 %v465, %v537
    %v539 = vpop.f32.mrf.mxu0
    %540 = vdwg.mxu0
    %v541 = vmax.f32 %v533, 0.0
    %v542 = vmax.f32 %v538, 0.0
    %v543 = vld [vmem:[#allocation2 + $0x60] sm:$0xff]
    %v544 = vld [vmem:[#allocation2 + $0x68] sm:$0xff]
    %v545 = vld [vmem:[#allocation2 + $0x70] sm:$0xff]
    %v546 = vld [vmem:[#allocation2 + $0x78] sm:$0xff]
    %v547 = vld [vmem:[#allocation2 + $0x80] sm:$0x1]
    %v548 = vlaneseq
    %v549 = vshrl.u32 %v548, 7
    %v550 = vsub.s32 0, %v549
    %v551 = vrot.slane %v547, %v550
    %v553 = vsel %vm213, %v541, 0
    %v556 = vsel %vm213, %v542, 0
    %558 = vmatprep.subr.mxu0 0.0
    %559 = vmatpush1.msra.mxu0 0.0
    %560 = vmatprep.subr.mxu0 0.0
    %561 = vmatpush1.msra.mxu0 0.0
    %562 = vmatprep.subr.mxu0 0.0
    %563 = vmatpush1.msra.mxu0 0.0
    %564 = vmatprep.subr.mxu0 0.0
    %565 = vmatpush1.msra.mxu0 0.0
    %566 = vmatprep.subr.mxu0 0.0
    %567 = vmatpush1.msra.mxu0 0.0
    %568 = vmatprep.subr.mxu0 0.0
    %569 = vmatpush1.msra.mxu0 0.0
    %570 = vmatprep.subr.mxu0 0.0
    %571 = vmatpush1.msra.mxu0 0.0
    %572 = vmatprep.subr.mxu0 0.0
    %573 = vmatpush1.msra.mxu0 0.0
    %574 = vmatprep.subr.mxu0 0.0
    %575 = vmatpush1.msra.mxu0 0.0
    %576 = vmatprep.subr.mxu0 0.0
    %577 = vmatpush1.msra.mxu0 0.0
    %578 = vmatprep.subr.mxu0 0.0
    %579 = vmatpush1.msra.mxu0 0.0
    %580 = vmatprep.subr.mxu0 0.0
    %581 = vmatpush1.msra.mxu0 0.0
    %582 = vmatprep.subr.mxu0 0.0
    %583 = vmatpush1.msra.mxu0 %v546
    %584 = vmatprep.subr.mxu0 0.0
    %585 = vmatpush1.msra.mxu0 %v545
    %586 = vmatprep.subr.mxu0 0.0
    %587 = vmatpush1.msra.mxu0 %v544
    %588 = vmatprep.subr.mxu0 0.0
    %589 = vmatpush1.msra.mxu0 %v543
    %590 = vmatprep.subr.mxu0 0.0
    %591 = vmatpush2.msra.mxu0 0.0
    %592 = vmatprep.subr.mxu0 0.0
    %593 = vmatpush2.msra.mxu0 0.0
    %594 = vmatprep.subr.mxu0 0.0
    %595 = vmatpush2.msra.mxu0 0.0
    %596 = vmatprep.subr.mxu0 0.0
    %597 = vmatpush2.msra.mxu0 0.0
    %598 = vmatprep.subr.mxu0 0.0
    %599 = vmatpush2.msra.mxu0 0.0
    %600 = vmatprep.subr.mxu0 0.0
    %601 = vmatpush2.msra.mxu0 0.0
    %602 = vmatprep.subr.mxu0 0.0
    %603 = vmatpush2.msra.mxu0 0.0
    %604 = vmatprep.subr.mxu0 0.0
    %605 = vmatpush2.msra.mxu0 0.0
    %606 = vmatprep.subr.mxu0 0.0
    %607 = vmatpush2.msra.mxu0 0.0
    %608 = vmatprep.subr.mxu0 0.0
    %609 = vmatpush2.msra.mxu0 0.0
    %610 = vmatprep.subr.mxu0 0.0
    %611 = vmatpush2.msra.mxu0 0.0
    %612 = vmatprep.subr.mxu0 0.0
    %613 = vmatpush2.msra.mxu0 0.0
    %614 = vmatprep.subr.mxu0 0.0
    %615 = vmatpush2.msra.mxu0 0.0
    %616 = vmatprep.subr.mxu0 0.0
    %617 = vmatpush2.msra.mxu0 0.0
    %618 = vmatprep.subr.mxu0 0.0
    %619 = vmatpush2.msra.mxu0 0.0
    %620 = vmatprep.subr.mxu0 0.0
    %621 = vmatpush2.msra.mxu0 0.0
    %622 = vmatprep.mubr.f32.mxu0 0.0
    %623 = vmatmul.mubr.f32.gmra.mxu0 %v553
    %v624 = vpop.f32.mrf.mxu0
    %v625 = vadd.f32 %v551, %v624
    %v626 = vpop.f32.mrf.mxu0
    %627 = vmatprep.mubr.f32.mxu0 0.0
    %628 = vmatmul.mubr.f32.gmra.mxu0 %v556
    %v629 = vpop.f32.mrf.mxu0
    %v630 = vadd.f32 %v551, %v629
    %v631 = vpop.f32.mrf.mxu0
    %632 = vdwg.mxu0
    %v633 = vadd.f32 %v625, %v630
    %v634 = vrot.slane %v633, 4
    %v635 = vadd.f32 %v633, %v634
    %v636 = vrot.slane %v635, 2
    %v637 = vadd.f32 %v635, %v636
    %v638 = vrot.slane %v637, 1
    %v639 = vadd.f32 %v637, %v638
    %v640 = vrcp.pop 16.0
    %v641 = vmul.f32 %v639, %v640
    %642 = vst [vmem:[%s3] sm:$0xff] %v625
    %643 = vst [vmem:[%s3 + $0x8] sm:$0xff] %v630
    %644 = vst [vmem:[%s3 + $0x10] sm:$0xff] %v641
    // Predicated region
    $region18: #{forward.1} parent=1 // pred_check
      _
    $region19: #{forward.1} parent=1 // pred_check_branch
      %646 = sbr.rel (0) target = $region21
    $region20: #{forward.1} parent=1 // pred_region
      _
    $region21: #{forward.1} parent=1 // pred_fallthru
      _
    // Predicated region
    $region22: #{forward.1} parent=1 // pred_check
      _
    $region23: #{forward.1} parent=1 // pred_check_branch
      %648 = sbr.rel (0) target = $region25
    $region24: #{forward.1} parent=1 // pred_region
      _
    $region25: #{forward.1} parent=1 // pred_fallthru
      _
    %649 = vsyncpa [#allocation3], 1

</llo_original>
